<compile_context>
chip_gen: v7x
topology: tpu7x:2x2x1
jax: 0.10.0
libtpu: 0.0.40
codegen_flags: <defaults>
</compile_context>

<pallas_src>
import functools

import jax
import jax.numpy as jnp
from jax import lax
from jax.experimental import pallas as pl
from jax.experimental.pallas import tpu as pltpu


def _round_up(x, m):
    return (x + m - 1) // m * m


def _triplet_tile_kernel(emb_ref, cen_ref, lab_ref, loss_ref, cnt_ref, *,
                         margin, b_real, c_real, tile_b):
    """One batch tile of OnlineTripletLoss (selector='hardest').

    emb_ref : (TB, Dp)   bf16  embeddings tile
    cen_ref : (Dp, Cp)   bf16  resident, L2-normalized, pre-transposed centers
    lab_ref : (TB, 1)    i32   labels tile
    loss_ref, cnt_ref : (1, 1, 128) f32  lane-dense per-tile partials
    """
    emb = emb_ref[...]
    cen = cen_ref[...]
    labels = lab_ref[...]

    # cos_matrix tile = embeddings @ centers.T  -> MXU, bf16 in / f32 accumulate.
    cos = jnp.dot(emb, cen, preferred_element_type=jnp.float32)   # (TB, Cp)

    tb, cp = cos.shape
    col_ids = lax.broadcasted_iota(jnp.int32, (tb, cp), 1)
    valid_col = col_ids < c_real                       # mask C padding
    pos_mask = (col_ids == labels) & valid_col         # one-hot positive column

    # positive_cos = cos_matrix[row, label]
    positive = jnp.sum(jnp.where(pos_mask, cos, 0.0), axis=1, keepdims=True)
    # hardest negative: max over valid, non-label columns
    neg_masked = jnp.where(pos_mask | (~valid_col), -jnp.inf, cos)
    hardest_neg = jnp.max(neg_masked, axis=1, keepdims=True)

    # loss_value = max_{j != y} cos_ij + margin - cos_iy   (selector='hardest')
    loss_value = hardest_neg + jnp.float32(margin) - positive     # (TB, 1)
    losses = jnp.maximum(loss_value, 0.0)

    # Mask out batch-padding rows (zero embeddings would otherwise add `margin`).
    row_start = pl.program_id(0) * tile_b
    row_ids = lax.broadcasted_iota(jnp.int32, (tb, 1), 0) + row_start
    row_valid = (row_ids < b_real).astype(jnp.float32)

    tile_loss_sum = jnp.sum(losses * row_valid)
    tile_count = jnp.sum(jnp.where(loss_value > 0.0, row_valid, 0.0))

    # Lane-dense partial outputs (avoid masked (1,1) scalar stores).
    loss_ref[...] = jnp.zeros(loss_ref.shape, jnp.float32) + tile_loss_sum
    cnt_ref[...] = jnp.zeros(cnt_ref.shape, jnp.float32) + tile_count
    # TODO(synk): selectors 'hard' / 'semihard' are no-ops in the reference
    # forward (loss_value would be undefined); only 'hardest' is implemented.


def online_triplet_loss(embeddings, labels, centers, margin=0.3, *,
                        tile_b=None, vmem_budget_bytes=40 * 1024 * 1024):
    """Pallas TPU implementation of OnlineTripletLoss.forward (selector='hardest')."""
    b, d = embeddings.shape
    c = centers.shape[0]

    # __init__ glue: self.centers = F.normalize(centers)  (L2 along dim=1).
    cen_f32 = centers.astype(jnp.float32)
    cen_norm = cen_f32 / jnp.clip(
        jnp.linalg.norm(cen_f32, axis=1, keepdims=True), 1e-12, None)

    d_pad = _round_up(d, 128)            # MXU K granularity
    c_pad = _round_up(c, 128)            # lane width for the N dimension

    # Pre-transpose centers to (D, C) once here (no in-kernel .T), pad, cast bf16.
    cen_t = jnp.pad(cen_norm.T, ((0, d_pad - d), (0, c_pad - c))).astype(jnp.bfloat16)
    emb = jnp.pad(embeddings.astype(jnp.float32),
                  ((0, 0), (0, d_pad - d))).astype(jnp.bfloat16)

    if tile_b is None:
        # Budget: resident bf16 centers + double-buffered bf16 emb / i32 label
        # tiles + the f32 (TB, Cp) cos intermediate.  Conservative vs v7x 64 MiB.
        centers_bytes = d_pad * c_pad * 2
        avail = max(vmem_budget_bytes - centers_bytes, 1 << 20)
        per_row = 2 * (d_pad * 2 + 4) + c_pad * 4 + 64
        tile_b = max(16, min(512, (avail // per_row) // 16 * 16))
    tile_b = max(16, _round_up(int(tile_b), 16))
    tile_b = min(tile_b, _round_up(b, 16))

    b_pad = _round_up(b, tile_b)
    grid_b = b_pad // tile_b

    emb = jnp.pad(emb, ((0, b_pad - b), (0, 0)))
    labels2d = jnp.pad(labels.astype(jnp.int32).reshape(-1, 1),
                       ((0, b_pad - b), (0, 0)))

    kernel = functools.partial(_triplet_tile_kernel, margin=float(margin),
                               b_real=b, c_real=c, tile_b=tile_b)

    cost = pl.CostEstimate(
        flops=2 * b_pad * c_pad * d_pad,
        transcendentals=0,
        bytes_accessed=(b_pad * d_pad * 2 + d_pad * c_pad * 2
                        + b_pad * 4 + grid_b * 2 * 128 * 4),
    )

    loss_part, cnt_part = pl.pallas_call(
        kernel,
        out_shape=(
            jax.ShapeDtypeStruct((grid_b, 1, 128), jnp.float32),
            jax.ShapeDtypeStruct((grid_b, 1, 128), jnp.float32),
        ),
        grid_spec=pltpu.PrefetchScalarGridSpec(
            num_scalar_prefetch=0,
            grid=(grid_b,),
            in_specs=[
                pl.BlockSpec((tile_b, d_pad), lambda i: (i, 0)),   # embeddings tile
                pl.BlockSpec((d_pad, c_pad), lambda i: (0, 0)),    # resident centers
                pl.BlockSpec((tile_b, 1), lambda i: (i, 0)),       # labels tile
            ],
            out_specs=(
                pl.BlockSpec((1, 1, 128), lambda i: (i, 0, 0)),
                pl.BlockSpec((1, 1, 128), lambda i: (i, 0, 0)),
            ),
        ),
        compiler_params=pltpu.CompilerParams(
            dimension_semantics=("parallel",),
            vmem_limit_bytes=56 * 1024 * 1024,
        ),
        cost_estimate=cost,
    )(emb, cen_t, labels2d)

    # Final tiny reduction in plain JAX; divide by the *global* batch size.
    loss = jnp.sum(loss_part[:, 0, 0]) / jnp.float32(b)
    count = jnp.sum(cnt_part[:, 0, 0]).astype(jnp.int32)
    return loss, count


if __name__ == "__main__":
    B, D, C = 8, 32, 16   # batch, embedding dim, number of classes (centers)
    margin = 0.3

    key = jax.random.PRNGKey(0)
    k_emb, k_cen, k_lab = jax.random.split(key, 3)
    embeddings = jax.random.normal(k_emb, (B, D), dtype=jnp.float32)
    centers = jax.random.normal(k_cen, (C, D), dtype=jnp.float32)   # deterministic "params"
    labels = jax.random.randint(k_lab, (B,), 0, C, dtype=jnp.int32)

    loss, count = online_triplet_loss(embeddings, labels, centers, margin=margin)
    jax.block_until_ready((loss, count))

    # Pure-JAX reference using the same bf16 matmul operands / f32 accumulation.
    cen_n = centers / jnp.linalg.norm(centers, axis=1, keepdims=True)
    cos = jnp.dot(embeddings.astype(jnp.bfloat16), cen_n.T.astype(jnp.bfloat16),
                  preferred_element_type=jnp.float32)
    pos = cos[jnp.arange(B), labels][:, None]
    neg = jnp.where(jax.nn.one_hot(labels, C, dtype=jnp.bool_), -jnp.inf, cos)
    lv = jnp.max(neg, axis=1, keepdims=True) + margin - pos
    ref_loss = jnp.mean(jnp.maximum(lv, 0.0))
    ref_count = jnp.sum(lv > 0)

    assert jnp.allclose(loss, ref_loss, atol=2e-3), (loss, ref_loss)
    assert int(count) == int(ref_count), (count, ref_count)

    print("KERNEL_OK")
</pallas_src>

<mosaic_0001>
module attributes {stable_mosaic.version = 11 : i64} {
  func.func @_triplet_tile_kernel(%arg0: i32, %arg1: memref<16x128xbf16, #tpu.memory_space<vmem>>, %arg2: memref<128x128xbf16, #tpu.memory_space<vmem>>, %arg3: memref<16x1xi32, #tpu.memory_space<vmem>>, %arg4: memref<1x1x128xf32, #tpu.memory_space<vmem>>, %arg5: memref<1x1x128xf32, #tpu.memory_space<vmem>>) attributes {dimension_semantics = [#tpu.dimension_semantics<parallel>], iteration_bounds = array<i64: 1>, scalar_prefetch = 0 : i64, scratch_operands = 0 : i64, tpu.core_type = #tpu.core_type<tc>, window_params = [{transform_indices = @transform_0, window_bounds = array<i64: 16, 128>}, {pipeline_mode = #tpu.pipeline_mode<synchronous>, transform_indices = @transform_1, window_bounds = array<i64: 128, 128>}, {transform_indices = @transform_2, window_bounds = array<i64: 16, 1>}, {transform_indices = @transform_3, window_bounds = array<i64: 1, 1, 128>}, {transform_indices = @transform_4, window_bounds = array<i64: 1, 1, 128>}]} {
    %c0 = arith.constant 0 : index
    %c0_0 = arith.constant 0 : index
    %0 = vector.load %arg1[%c0, %c0_0] : memref<16x128xbf16, #tpu.memory_space<vmem>>, vector<16x128xbf16>
    %c0_1 = arith.constant 0 : index
    %c0_2 = arith.constant 0 : index
    %1 = vector.load %arg2[%c0_1, %c0_2] : memref<128x128xbf16, #tpu.memory_space<vmem>>, vector<128x128xbf16>
    %c0_3 = arith.constant 0 : index
    %c0_4 = arith.constant 0 : index
    %2 = vector.load %arg3[%c0_3, %c0_4] : memref<16x1xi32, #tpu.memory_space<vmem>>, vector<16x1xi32>
    %cst = arith.constant dense<0.000000e+00> : vector<16x128xf32>
    %3 = tpu.matmul %0, %1, %cst {dimension_numbers = #tpu.dot_dimension_numbers<[1], [0], [0], [1], [0, 0, 1, 1], [], []>} : vector<16x128xbf16>, vector<128x128xbf16>, vector<16x128xf32> -> vector<16x128xf32>
    %4 = tpu.iota {dimensions = array<i32: 1>} : vector<16x128xi32>
    %c16_i32 = arith.constant 16 : i32
    %5 = vector.broadcast %c16_i32 : i32 to vector<16x128xi32>
    %6 = arith.cmpi slt, %4, %5 : vector<16x128xi32>
    %7 = vector.broadcast %2 : vector<16x1xi32> to vector<16x128xi32>
    %8 = arith.cmpi eq, %4, %7 : vector<16x128xi32>
    %9 = arith.andi %8, %6 : vector<16x128xi1>
    %cst_5 = arith.constant 0.000000e+00 : f32
    %10 = vector.broadcast %cst_5 : f32 to vector<16x128xf32>
    %11 = arith.select %9, %3, %10 : vector<16x128xi1>, vector<16x128xf32>
    %cst_6 = arith.constant dense<0.000000e+00> : vector<16xf32>
    %12 = vector.multi_reduction <add>, %11, %cst_6 [1] : vector<16x128xf32> to vector<16xf32>
    %13 = vector.shape_cast %12 : vector<16xf32> to vector<16x1xf32>
    %cst_7 = arith.constant dense<true> : vector<16x128xi1>
    %14 = arith.xori %6, %cst_7 : vector<16x128xi1>
    %15 = arith.ori %9, %14 : vector<16x128xi1>
    %cst_8 = arith.constant 0xFF800000 : f32
    %16 = vector.broadcast %cst_8 : f32 to vector<16x128xf32>
    %17 = arith.select %15, %16, %3 : vector<16x128xi1>, vector<16x128xf32>
    %cst_9 = arith.constant dense<0xFF800000> : vector<16xf32>
    %18 = vector.multi_reduction <maximumf>, %17, %cst_9 [1] : vector<16x128xf32> to vector<16xf32>
    %19 = vector.shape_cast %18 : vector<16xf32> to vector<16x1xf32>
    %cst_10 = arith.constant 3.000000e-01 : f32
    %20 = vector.broadcast %cst_10 : f32 to vector<16x1xf32>
    %21 = arith.addf %19, %20 : vector<16x1xf32>
    %22 = arith.subf %21, %13 : vector<16x1xf32>
    %cst_11 = arith.constant 0.000000e+00 : f32
    %23 = vector.broadcast %cst_11 : f32 to vector<16x1xf32>
    %24 = arith.maximumf %22, %23 : vector<16x1xf32>
    %c16_i32_12 = arith.constant 16 : i32
    %25 = arith.muli %arg0, %c16_i32_12 : i32
    %26 = tpu.iota {dimensions = array<i32: 0>} : vector<16x1xi32>
    %27 = vector.broadcast %25 : i32 to vector<16x1xi32>
    %28 = arith.addi %26, %27 : vector<16x1xi32>
    %c8_i32 = arith.constant 8 : i32
    %29 = vector.broadcast %c8_i32 : i32 to vector<16x1xi32>
    %30 = arith.cmpi slt, %28, %29 : vector<16x1xi32>
    %31 = arith.extui %30 : vector<16x1xi1> to vector<16x1xi32>
    %32 = arith.sitofp %31 : vector<16x1xi32> to vector<16x1xf32>
    %33 = arith.mulf %24, %32 : vector<16x1xf32>
    %34 = vector.shape_cast %33 : vector<16x1xf32> to vector<1x16x1xf32>
    %cst_13 = arith.constant dense<0.000000e+00> : vector<1xf32>
    %35 = vector.multi_reduction <add>, %34, %cst_13 [1, 2] : vector<1x16x1xf32> to vector<1xf32>
    %36 = vector.shape_cast %35 : vector<1xf32> to vector<1x1x1xf32>
    %37 = vector.extract %36[0, 0, 0] : f32 from vector<1x1x1xf32>
    %cst_14 = arith.constant 0.000000e+00 : f32
    %38 = vector.broadcast %cst_14 : f32 to vector<16x1xf32>
    %39 = arith.cmpf ogt, %22, %38 : vector<16x1xf32>
    %cst_15 = arith.constant 0.000000e+00 : f32
    %40 = vector.broadcast %cst_15 : f32 to vector<16x1xf32>
    %41 = arith.select %39, %32, %40 : vector<16x1xi1>, vector<16x1xf32>
    %42 = vector.shape_cast %41 : vector<16x1xf32> to vector<1x16x1xf32>
    %cst_16 = arith.constant dense<0.000000e+00> : vector<1xf32>
    %43 = vector.multi_reduction <add>, %42, %cst_16 [1, 2] : vector<1x16x1xf32> to vector<1xf32>
    %44 = vector.shape_cast %43 : vector<1xf32> to vector<1x1x1xf32>
    %45 = vector.extract %44[0, 0, 0] : f32 from vector<1x1x1xf32>
    %cst_17 = arith.constant 0.000000e+00 : f32
    %46 = vector.broadcast %cst_17 : f32 to vector<1x1x128xf32>
    %47 = vector.broadcast %37 : f32 to vector<1x1x128xf32>
    %48 = arith.addf %46, %47 : vector<1x1x128xf32>
    %c0_18 = arith.constant 0 : index
    %c0_19 = arith.constant 0 : index
    %c0_20 = arith.constant 0 : index
    %49 = vector.load %arg4[%c0_18, %c0_19, %c0_20] : memref<1x1x128xf32, #tpu.memory_space<vmem>>, vector<1x1x128xf32>
    tpu.vector_store %arg4[%c0_18, %c0_19, %c0_20], %48 {strides = array<i32>} : memref<1x1x128xf32, #tpu.memory_space<vmem>>, vector<1x1x128xf32>,
    %cst_21 = arith.constant 0.000000e+00 : f32
    %50 = vector.broadcast %cst_21 : f32 to vector<1x1x128xf32>
    %51 = vector.broadcast %45 : f32 to vector<1x1x128xf32>
    %52 = arith.addf %50, %51 : vector<1x1x128xf32>
    %c0_22 = arith.constant 0 : index
    %c0_23 = arith.constant 0 : index
    %c0_24 = arith.constant 0 : index
    %53 = vector.load %arg5[%c0_22, %c0_23, %c0_24] : memref<1x1x128xf32, #tpu.memory_space<vmem>>, vector<1x1x128xf32>
    tpu.vector_store %arg5[%c0_22, %c0_23, %c0_24], %52 {strides = array<i32>} : memref<1x1x128xf32, #tpu.memory_space<vmem>>, vector<1x1x128xf32>,
    return
  }
  func.func @transform_0(%arg0: i32) -> (i32, i32) {
    %c0_i32 = arith.constant 0 : i32
    %c0_i32_0 = arith.constant 0 : i32
    return %arg0, %c0_i32 : i32, i32
  }
  func.func @transform_1(%arg0: i32) -> (i32, i32) {
    %c0_i32 = arith.constant 0 : i32
    %c0_i32_0 = arith.constant 0 : i32
    %c0_i32_1 = arith.constant 0 : i32
    return %c0_i32, %c0_i32_0 : i32, i32
  }
  func.func @transform_2(%arg0: i32) -> (i32, i32) {
    %c0_i32 = arith.constant 0 : i32
    %c0_i32_0 = arith.constant 0 : i32
    return %arg0, %c0_i32 : i32, i32
  }
  func.func @transform_3(%arg0: i32) -> (i32, i32, i32) {
    %c0_i32 = arith.constant 0 : i32
    %c0_i32_0 = arith.constant 0 : i32
    %c0_i32_1 = arith.constant 0 : i32
    return %arg0, %c0_i32, %c0_i32_0 : i32, i32, i32
  }
  func.func @transform_4(%arg0: i32) -> (i32, i32, i32) {
    %c0_i32 = arith.constant 0 : i32
    %c0_i32_0 = arith.constant 0 : i32
    %c0_i32_1 = arith.constant 0 : i32
    return %arg0, %c0_i32, %c0_i32_0 : i32, i32, i32
  }
}

</mosaic_0001>

<llo_original>
// kernel: tpu_custom_call.1
$region0: #{tpu_custom_call.1}
  #allocation0 [shape = 'u32[]', space=smem, size = 0x4, offset = 0x4, fixed_abs, tag = 'smem constant byte address 0x4 - core index']
  #allocation1 [shape = 'u32[144,128]{1,0:T(1,128)}', space=vmem, size = 0x12000, scoped, tag = 'internal scratch']
  %s0 = inlined_call_operand.vmem [shape: bf16[16,128], index: 0, kind: input, shape index: {}]
  %s1 = inlined_call_operand.hbm [shape: bf16[128,128], index: 1, kind: input, shape index: {}]
  %s2 = inlined_call_operand.vmem [shape: s32[16,1], index: 2, kind: input, shape index: {}]
  %s3 = inlined_call_operand.hbm [shape: f32[1,1,128], index: 3, kind: output, shape index: {0}]
  %s4 = inlined_call_operand.hbm [shape: f32[1,1,128], index: 4, kind: output, shape index: {1}]
  %5 = xla_tuple %s3, %s4
  %s6 = sld [smem:[#allocation0]]
  $region34: #{tpu_custom_call.1} parent=0
    _
  %s8 = ssub.s32 1, %s6
  %s9 = scalar_select 0, %s8, %s6
  $region1: #{tpu_custom_call.1} parent=0
    #allocation2 [shape = 'u8[32768]{0}', space=vmem, size = 0x8000, scoped, tag = 'input window, operand 1, single buffered']
    #allocation3 [shape = 's32[1]{0}', space=sflag, size = 0x4, scoped, tag = 'scoped memory for tpu_custom_call.1']
    #allocation4 [shape = 's32[1]{0}', space=sflag, size = 0x4, scoped, tag = 'scoped memory for tpu_custom_call.1']
    #allocation5 [shape = 'u8[512]{0}', space=vmem, size = 0x400, scoped, tag = 'output window, operand 0, single buffered']
    #allocation6 [shape = 'u8[512]{0}', space=vmem, size = 0x400, scoped, tag = 'output window, operand 1, single buffered']
    #allocation7 [shape = 's32[1]{0}', space=sflag, size = 0x4, scoped, tag = 'scoped memory for tpu_custom_call.1']
    %10 = vsyncpa [#allocation3], 0
    %11 = vsyncpa [#allocation4], 0
    %12 = vsyncpa [#allocation7], 0
    // Predicated region
    $region2: #{tpu_custom_call.1} parent=1 // pred_check
      _
    $region3: #{tpu_custom_call.1} parent=1 // pred_check_branch
      %14 = sbr.rel (0) target = $region5
    $region4: #{tpu_custom_call.1} parent=1 // pred_region
      _
    $region5: #{tpu_custom_call.1} parent=1 // pred_fallthru
      _
    // Predicated region
    $region6: #{tpu_custom_call.1} parent=1 // pred_check
      _
    $region7: #{tpu_custom_call.1} parent=1 // pred_check_branch
      %16 = sbr.rel (0) target = $region9
    $region8: #{tpu_custom_call.1} parent=1 // pred_region
      %s18 = ssub.s32 1024, 1024
      %19 = vsyncadd [#allocation3], %s18
      %s20 = sshll.u32 [#allocation2], 4
      %s21 = int_to_ptr.vmem [resolvable:$true] %s20
      %26 = dma.hbm_to_vmem [thread:$0]  %s1, 1024, %s21, [#allocation3], 64, 64, 4
    $region9: #{tpu_custom_call.1} parent=1 // pred_fallthru
      _
    // Predicated region
    $region10: #{tpu_custom_call.1} parent=1 // pred_check
      _
    $region11: #{tpu_custom_call.1} parent=1 // pred_check_branch
      %28 = sbr.rel (0) target = $region13
    $region12: #{tpu_custom_call.1} parent=1 // pred_region
      _
    $region13: #{tpu_custom_call.1} parent=1 // pred_fallthru
      _
    // Predicated region
    $region14: #{tpu_custom_call.1} parent=1 // pred_check
      _
    $region15: #{tpu_custom_call.1} parent=1 // pred_check_branch
      %30 = sbr.rel (0) target = $region17
    $region16: #{tpu_custom_call.1} parent=1 // pred_region
      %31 = dma.done [#allocation3], 1024
    $region17: #{tpu_custom_call.1} parent=1 // pred_fallthru
      _
    %v33 = vld [vmem:[%s0] sm:$0xf]
    %v34 = vld [vmem:[%s0 + $0x4] sm:$0xf]
    %v35 = vld [vmem:[#allocation2] sm:$0xf]
    %v36 = vld [vmem:[#allocation2 + $0x4] sm:$0xf]
    %v37 = vld [vmem:[#allocation2 + $0x8] sm:$0xf]
    %v38 = vld [vmem:[#allocation2 + $0xc] sm:$0xf]
    %v39 = vld [vmem:[#allocation2 + $0x10] sm:$0xf]
    %v40 = vld [vmem:[#allocation2 + $0x14] sm:$0xf]
    %v41 = vld [vmem:[#allocation2 + $0x18] sm:$0xf]
    %v42 = vld [vmem:[#allocation2 + $0x1c] sm:$0xf]
    %v43 = vld [vmem:[#allocation2 + $0x20] sm:$0xf]
    %v44 = vld [vmem:[#allocation2 + $0x24] sm:$0xf]
    %v45 = vld [vmem:[#allocation2 + $0x28] sm:$0xf]
    %v46 = vld [vmem:[#allocation2 + $0x2c] sm:$0xf]
    %v47 = vld [vmem:[#allocation2 + $0x30] sm:$0xf]
    %v48 = vld [vmem:[#allocation2 + $0x34] sm:$0xf]
    %v49 = vld [vmem:[#allocation2 + $0x38] sm:$0xf]
    %v50 = vld [vmem:[#allocation2 + $0x3c] sm:$0xf]
    %v51 = vld [vmem:[%s2] sm:$0xff]
    %v52 = vld [vmem:[%s2 + $0x8] sm:$0xff]
    %v55 = vunpack.c.l.b16 %v33
    %v56 = vunpack.c.l.b16 %v34
    %v57 = vpack.c.b16 %v56, %v55
    %v75 = vunpack.c.l.b16 %v35
    %v76 = vunpack.c.l.b16 %v36
    %v77 = vunpack.c.l.b16 %v37
    %v78 = vunpack.c.l.b16 %v38
    %v79 = vunpack.c.l.b16 %v39
    %v80 = vunpack.c.l.b16 %v40
    %v81 = vunpack.c.l.b16 %v41
    %v82 = vunpack.c.l.b16 %v42
    %v83 = vunpack.c.l.b16 %v43
    %v84 = vunpack.c.l.b16 %v44
    %v85 = vunpack.c.l.b16 %v45
    %v86 = vunpack.c.l.b16 %v46
    %v87 = vunpack.c.l.b16 %v47
    %v88 = vunpack.c.l.b16 %v48
    %v89 = vunpack.c.l.b16 %v49
    %v90 = vunpack.c.l.b16 %v50
    %v91 = vpack.c.b16 %v76, %v75
    %v92 = vpack.c.b16 %v78, %v77
    %v93 = vpack.c.b16 %v80, %v79
    %v94 = vpack.c.b16 %v82, %v81
    %v95 = vpack.c.b16 %v84, %v83
    %v96 = vpack.c.b16 %v86, %v85
    %v97 = vpack.c.b16 %v88, %v87
    %v98 = vpack.c.b16 %v90, %v89
    %107 = vmatprep.subr.bf16.mxu0 0
    %108 = vmatpush1.bf16.msra.mxu0 %v91
    %109 = vmatprep.subr.bf16.mxu0 0
    %110 = vmatpush1.bf16.msra.mxu0 %v92
    %111 = vmatprep.subr.bf16.mxu0 0
    %112 = vmatpush1.bf16.msra.mxu0 %v93
    %113 = vmatprep.subr.bf16.mxu0 0
    %114 = vmatpush1.bf16.msra.mxu0 %v94
    %115 = vmatprep.subr.bf16.mxu0 0
    %116 = vmatpush1.bf16.msra.mxu0 %v95
    %117 = vmatprep.subr.bf16.mxu0 0
    %118 = vmatpush1.bf16.msra.mxu0 %v96
    %119 = vmatprep.subr.bf16.mxu0 0
    %120 = vmatpush1.bf16.msra.mxu0 %v97
    %121 = vmatprep.subr.bf16.mxu0 0
    %122 = vmatpush1.bf16.msra.mxu0 %v98
    %123 = vmatprep.subr.bf16.mxu0 0
    %124 = vmatpush1.bf16.msra.mxu0 0
    %125 = vmatprep.subr.bf16.mxu0 0
    %126 = vmatpush1.bf16.msra.mxu0 0
    %127 = vmatprep.subr.bf16.mxu0 0
    %128 = vmatpush1.bf16.msra.mxu0 0
    %129 = vmatprep.subr.bf16.mxu0 0
    %130 = vmatpush1.bf16.msra.mxu0 0
    %131 = vmatprep.subr.bf16.mxu0 0
    %132 = vmatpush1.bf16.msra.mxu0 0
    %133 = vmatprep.subr.bf16.mxu0 0
    %134 = vmatpush1.bf16.msra.mxu0 0
    %135 = vmatprep.subr.bf16.mxu0 0
    %136 = vmatpush1.bf16.msra.mxu0 0
    %137 = vmatprep.subr.bf16.mxu0 0
    %138 = vmatpush1.bf16.msra.mxu0 0
    %139 = vmatprep.mubr.bf16.mxu0 0
    %140 = vmatmul.mubr.bf16.gmra.mrb[0].mxu0 %v57
    %v141 = vpop.f32.mrb[0].mxu0
    %v142 = vadd.f32 0.0, %v141
    %v143 = vpop.f32.mrb[0].mxu0
    %v144 = vpop.f32.mrb[0].mxu0
    %v145 = vadd.f32 0.0, %v144
    %v146 = vpop.f32.mrb[0].mxu0
    %147 = vdwg.mxu0
    %v148 = vlaneseq
    %v149 = vand.u32 %v148, 127
    %vm150 = vcmp.lt.s32.totalorder %v149, 16
    %151 = vset.pattern.permute.xlu0 0
    %152 = vperm.xlu0 %151, %v51
    %v153 = vpop.permute.xlu0 %152
    %154 = vset.pattern.permute.xlu0 0
    %155 = vperm.xlu0 %154, %v52
    %v156 = vpop.permute.xlu0 %155
    %vm157 = vcmp.eq.s32.totalorder %v149, %v153
    %vm158 = vcmp.eq.s32.totalorder %v149, %v156
    %vm159 = vmand %vm157, %vm150
    %vm160 = vmand %vm158, %vm150
    %v161 = vsel %vm159, %v142, 0.0
    %v162 = vsel %vm160, %v145, 0.0
    %163 = vadd.xlane.f32.xlu0 %v161
    %v164 = vpop.xlane.xlu0 %163
    %165 = vadd.xlane.f32.xlu0 %v162
    %v166 = vpop.xlane.xlu0 %165
    %vm167 = vmxor %vm150, 1
    %vm168 = vmor %vm159, %vm167
    %vm169 = vmor %vm160, %vm167
    %v170 = vsel %vm168, -inf, %v142
    %v171 = vsel %vm169, -inf, %v145
    %172 = vmax.xlane.f32.xlu0 %v170
    %v173 = vpop.xlane.xlu0 %172
    %174 = vmax.xlane.f32.xlu0 %v171
    %v175 = vpop.xlane.xlu0 %174
    %v176 = vadd.f32 %v173, 0.3
    %v177 = vadd.f32 %v175, 0.3
    %v178 = vsub.f32 %v176, %v164
    %v179 = vsub.f32 %v177, %v166
    %v180 = vmax.f32 %v178, 0.0
    %v181 = vmax.f32 %v179, 0.0
    %s182 = smul.u32 0, 16
    %v183 = vlaneseq
    %v184 = vshrl.u32 %v183, 7
    %v185 = vadd.s32 %v184, 8
    %v186 = vstv %s182
    %v187 = vadd.s32 %v184, %v186
    %v188 = vadd.s32 %v185, %v186
    %vm189 = vcmp.lt.s32.totalorder %v187, 8
    %vm190 = vcmp.lt.s32.totalorder %v188, 8
    %v191 = vsel %vm189, 1, 0
    %v192 = vsel %vm190, 1, 0
    %v193 = vcvt.s32.f32 %v191
    %v194 = vcvt.s32.f32 %v192
    %v195 = vmul.f32 %v180, %v193
    %v196 = vmul.f32 %v181, %v194
    %vm197 = vcmask 7168
    %v198 = vsel %vm197, %v195, 0.0
    %v199 = vsel %vm197, %v196, 0.0
    %v200 = vadd.f32 %v198, %v199
    %201 = vadd.xlane.f32.xlu0 %v200
    %v202 = vpop.xlane.xlu0 %201
    %v203 = vrot.slane %v202, 4
    %v204 = vadd.f32 %v202, %v203
    %v205 = vrot.slane %v204, 2
    %v206 = vadd.f32 %v204, %v205
    %v207 = vrot.slane %v206, 1
    %v208 = vadd.f32 %v206, %v207
    %s209 = vtos %v208
    %vm210 = vcmp.gt.f32.partialorder %v178, 0.0
    %vm211 = vcmp.gt.f32.partialorder %v179, 0.0
    %v212 = vsel %vm210, %v193, 0.0
    %v213 = vsel %vm211, %v194, 0.0
    %v214 = vsel %vm197, %v212, 0.0
    %v215 = vsel %vm197, %v213, 0.0
    %v216 = vadd.f32 %v214, %v215
    %217 = vadd.xlane.f32.xlu0 %v216
    %v218 = vpop.xlane.xlu0 %217
    %v219 = vrot.slane %v218, 4
    %v220 = vadd.f32 %v218, %v219
    %v221 = vrot.slane %v220, 2
    %v222 = vadd.f32 %v220, %v221
    %v223 = vrot.slane %v222, 1
    %v224 = vadd.f32 %v222, %v223
    %s225 = vtos %v224
    %v226 = vstv %s209
    %v227 = vadd.f32 %v226, 0.0
    %228 = vst [vmem:[#allocation5] sm:$0x1] %v227
    %v229 = vstv %s225
    %v230 = vadd.f32 %v229, 0.0
    %231 = vst [vmem:[#allocation6] sm:$0x1] %v230
    // Predicated region
    $region18: #{tpu_custom_call.1} parent=1 // pred_check
      _
    $region19: #{tpu_custom_call.1} parent=1 // pred_check_branch
      %233 = sbr.rel (0) target = $region21
    $region20: #{tpu_custom_call.1} parent=1 // pred_region
      %s235 = ssub.s32 16, 16
      %236 = vsyncadd [#allocation4], %s235
      %s238 = sshll.u32 [#allocation5], 4
      %s239 = int_to_ptr.vmem [resolvable:$true] %s238
      %241 = dma.vmem_to_hbm [thread:$0]  %s239, 16, %s3, [#allocation4]
    $region21: #{tpu_custom_call.1} parent=1 // pred_fallthru
      _
    // Predicated region
    $region22: #{tpu_custom_call.1} parent=1 // pred_check
      _
    $region23: #{tpu_custom_call.1} parent=1 // pred_check_branch
      %243 = sbr.rel (0) target = $region25
    $region24: #{tpu_custom_call.1} parent=1 // pred_region
      %s245 = ssub.s32 16, 16
      %246 = vsyncadd [#allocation7], %s245
      %s248 = sshll.u32 [#allocation6], 4
      %s249 = int_to_ptr.vmem [resolvable:$true] %s248
      %251 = dma.vmem_to_hbm [thread:$0]  %s249, 16, %s4, [#allocation7]
    $region25: #{tpu_custom_call.1} parent=1 // pred_fallthru
      _
    // Predicated region
    $region26: #{tpu_custom_call.1} parent=1 // pred_check
      _
    $region27: #{tpu_custom_call.1} parent=1 // pred_check_branch
      %253 = sbr.rel (0) target = $region29
    $region28: #{tpu_custom_call.1} parent=1 // pred_region
      %254 = dma.done [#allocation4], 16
    $region29: #{tpu_custom_call.1} parent=1 // pred_fallthru
      _
    // Predicated region
    $region30: #{tpu_custom_call.1} parent=1 // pred_check
      _
    $region31: #{tpu_custom_call.1} parent=1 // pred_check_branch
      %256 = sbr.rel (0) target = $region33
    $region32: #{tpu_custom_call.1} parent=1 // pred_region
      %257 = dma.done [#allocation7], 16
    $region33: #{tpu_custom_call.1} parent=1 // pred_fallthru
      _
    %258 = vsyncpa [#allocation3], 1
    %259 = vsyncpa [#allocation4], 1
    %260 = vsyncpa [#allocation7], 1

</llo_original>
